<compile_context>
chip_gen: v5e
topology: v5e:2x2
jax: 0.10.0
libtpu: 0.0.40
codegen_flags: <defaults>
</compile_context>

<pallas_src>
import functools
import math

import jax
import jax.numpy as jnp
from jax.experimental import pallas as pl
from jax.experimental.pallas import tpu as pltpu


def _round_up(a, b):
    return (a + b - 1) // b * b


def _label_smoothing_kernel(col_ref, w_ref, tgt_ref, x_ref, out_ref, *,
                            padding_idx, confidence):
    i = pl.program_id(1)   # arbitrary axis (row tiles owned by this slice)

    @pl.when(i == 0)
    def _():
        out_ref[...] = jnp.zeros_like(out_ref)

    x = x_ref[...].astype(jnp.float32)      # (tn, V) log-probs (bf16 inputs upcast here)
    tgt = tgt_ref[...]                      # (tn, 1) int32 (padded rows carry padding_idx)
    col = col_ref[...]                      # (1, V)  int32 column ids (resident)
    w_col = w_ref[...]                      # (1, V)  f32: smooth_val, 0 at padding column

    # Row mask via select (NOT multiply): edge tiles of x may contain unspecified data,
    # and rows whose target is padding_idx contribute nothing.
    row_ok = tgt != padding_idx             # (tn, 1) bool
    x = jnp.where(row_ok, x, 0.0)

    # coef[row, c] = confidence at the target column, smooth_val at other valid columns,
    # 0 at the padding column.  (xlogy constants are added outside the kernel.)
    coef = jnp.where(col == tgt, confidence, w_col)     # (tn, V)
    contrib = coef * x

    # One lane-dense (1, V) RMW per step into the small resident output block.
    out_ref[0:1, :] += jnp.sum(contrib, axis=0, keepdims=True)


def _chip_defaults():
    """Best-effort (num_parallel, block_bytes, vmem_limit_bytes) per TPU generation."""
    vmem_cap = 64 << 20
    try:
        vmem_cap = int(pltpu.get_tpu_info().vmem_capacity_bytes)
    except Exception:
        pass
    if vmem_cap >= (128 << 20):           # v5e / v6e: 128 MiB physical VMEM
        block_bytes, vmem_limit = 16 << 20, 96 << 20
    else:                                 # v7x: 64 MiB per TC -> stay well under
        block_bytes, vmem_limit = 8 << 20, 48 << 20

    num_parallel = 1
    try:
        d = jax.devices()[0]
        nc = getattr(d, "num_cores", None) or getattr(d, "core_count", None)
        if isinstance(nc, int) and nc >= 2:
            num_parallel = 2              # 2 TensorCores per chip (v7x-style)
    except Exception:
        pass
    return num_parallel, block_bytes, vmem_limit


def label_smoothing_loss(x, target, *, size, padding_idx, smoothing=0.0,
                         block_bytes=None, num_parallel=None,
                         vmem_limit_bytes=None):
    """Pallas implementation of LabelSmoothing.forward. Returns the scalar sum-reduced KL loss."""
    N, V = x.shape
    assert V == size, "x.size(1) must equal self.size"
    assert size > 2, "label smoothing requires size > 2 (smoothing / (size - 2))"
    assert 0.0 <= smoothing <= 1.0, "smoothing must lie in [0, 1]"

    confidence = 1.0 - smoothing
    smooth_val = smoothing / (size - 2)
    c_log_c = confidence * math.log(confidence) if confidence > 0.0 else 0.0
    s_log_s = smooth_val * math.log(smooth_val) if smooth_val > 0.0 else 0.0
    # xlogy(td, td) summed over one active row: target col + (V-2) smoothed cols.
    row_const = c_log_c + (size - 2) * s_log_s

    auto_p, auto_bb, auto_vl = _chip_defaults()
    P = int(num_parallel) if num_parallel is not None else auto_p
    block_bytes = int(block_bytes) if block_bytes is not None else auto_bb
    vmem_limit = int(vmem_limit_bytes) if vmem_limit_bytes is not None else auto_vl

    # ---- tiling (no padded copy of x) -------------------------------------
    itemsize = x.dtype.itemsize
    N8 = _round_up(N, 8)
    P = max(1, min(P, N8 // 8))                              # don't over-shard tiny inputs

    tn_cap = max(8, (block_bytes // (V * itemsize)) // 8 * 8)  # ~block_bytes of x per block
    rows_per_slice = _round_up(pl.cdiv(N8, P), 8)
    tn = min(tn_cap, rows_per_slice)
    G = pl.cdiv(rows_per_slice, tn)                          # inner (arbitrary) grid size
    N_pad = P * G * tn
    # TODO(synk): add a vocab-axis grid dimension for very large V where even an
    # 8-row x block would not fit comfortably in the VMEM budget.

    # Tiny side inputs only (x itself is untouched):
    #   targets padded with padding_idx -> padded / edge rows contribute exactly zero,
    #   per-column coefficient vector and column ids resident in VMEM for the whole grid.
    tgt_p = jnp.full((N_pad, 1), padding_idx, jnp.int32).at[:N, 0].set(
        target.astype(jnp.int32))
    col_ids = jnp.arange(V, dtype=jnp.int32).reshape(1, V)
    w_col = jnp.full((1, V), smooth_val, jnp.float32).at[0, padding_idx].set(0.0)

    # Clamp x block indices so a fully-out-of-range tile (possible when N is tiny and
    # P > 1) just re-reads a valid tile; its rows are masked off via the padded target.
    last_xblk = max(0, (N - 1) // tn)

    kernel = functools.partial(
        _label_smoothing_kernel,
        padding_idx=int(padding_idx),
        confidence=float(confidence),
    )

    partials = pl.pallas_call(
        kernel,
        out_shape=jax.ShapeDtypeStruct((P * 8, V), jnp.float32),
        grid_spec=pltpu.PrefetchScalarGridSpec(
            num_scalar_prefetch=0,
            grid=(P, G),
            in_specs=[
                pl.BlockSpec((1, V), lambda p, i: (0, 0)),           # column ids (resident)
                pl.BlockSpec((1, V), lambda p, i: (0, 0)),           # per-column coef (resident)
                pl.BlockSpec((tn, 1), lambda p, i: (p * G + i, 0)),  # targets (tiny block)
                pl.BlockSpec((tn, V),
                             lambda p, i: (jnp.minimum(p * G + i, last_xblk), 0)),
            ],
            # One small resident accumulator block per parallel slice (no cross-slice races).
            out_specs=pl.BlockSpec((8, V), lambda p, i: (p, 0)),
        ),
        compiler_params=pltpu.CompilerParams(
            dimension_semantics=("parallel", "arbitrary"),
            vmem_limit_bytes=vmem_limit),
    )(col_ids, w_col, tgt_p, x)

    # loss = sum(xlogy(td, td)) - sum(td * x)
    num_active = jnp.sum((target != padding_idx).astype(jnp.float32))
    return num_active * jnp.float32(row_const) - jnp.sum(partials)


def _reference_loss(x, target, *, size, padding_idx, smoothing):
    # Pure-JAX reference matching the PyTorch module (sanity check).
    N, V = x.shape
    confidence = 1.0 - smoothing
    smooth_val = smoothing / (size - 2)
    td = jnp.full((N, V), smooth_val, jnp.float32)
    td = td.at[jnp.arange(N), target].set(confidence)
    td = td.at[:, padding_idx].set(0.0)
    td = jnp.where((target == padding_idx)[:, None], 0.0, td)
    pt = jnp.where(td > 0, td * (jnp.log(jnp.where(td > 0, td, 1.0)) - x), 0.0)
    return jnp.sum(pt)


if __name__ == "__main__":
    # Small shapes consistent with the module: N = 16 positions, vocab size = 32.
    N, V = 16, 32
    padding_idx = 0
    smoothing = 0.1

    key = jax.random.PRNGKey(0)
    k1, k2 = jax.random.split(key)
    logits = jax.random.normal(k1, (N, V), dtype=jnp.float32)
    x = jax.nn.log_softmax(logits, axis=-1)                     # module expects log-probs
    target = jax.random.randint(k2, (N,), 0, V, dtype=jnp.int32)
    target = target.at[3].set(padding_idx)                      # include some padding rows
    target = target.at[11].set(padding_idx)

    loss = label_smoothing_loss(
        x, target, size=V, padding_idx=padding_idx, smoothing=smoothing)
    loss = jax.block_until_ready(loss)

    ref = _reference_loss(
        x, target, size=V, padding_idx=padding_idx, smoothing=smoothing)
    assert jnp.allclose(loss, ref, rtol=1e-5, atol=1e-4), (loss, ref)

    print("KERNEL_OK")
</pallas_src>

<mosaic_0001>
module attributes {stable_mosaic.version = 11 : i64} {
  func.func @_label_smoothing_kernel(%arg0: i32, %arg1: i32, %arg2: memref<1x32xi32, #tpu.memory_space<vmem>>, %arg3: memref<1x32xf32, #tpu.memory_space<vmem>>, %arg4: memref<16x1xi32, #tpu.memory_space<vmem>>, %arg5: memref<16x32xf32, #tpu.memory_space<vmem>>, %arg6: memref<8x32xf32, #tpu.memory_space<vmem>>) attributes {dimension_semantics = [#tpu.dimension_semantics<parallel>, #tpu.dimension_semantics<arbitrary>], iteration_bounds = array<i64: 1, 1>, scalar_prefetch = 0 : i64, scratch_operands = 0 : i64, tpu.core_type = #tpu.core_type<tc>, window_params = [{pipeline_mode = #tpu.pipeline_mode<synchronous>, transform_indices = @transform_0, window_bounds = array<i64: 1, 32>}, {pipeline_mode = #tpu.pipeline_mode<synchronous>, transform_indices = @transform_1, window_bounds = array<i64: 1, 32>}, {transform_indices = @transform_2, window_bounds = array<i64: 16, 1>}, {transform_indices = @transform_3, window_bounds = array<i64: 16, 32>}, {transform_indices = @transform_4, window_bounds = array<i64: 8, 32>}]} {
    %c0_i32 = arith.constant 0 : i32
    %0 = arith.cmpi eq, %arg1, %c0_i32 : i32
    %1 = arith.extui %0 : i1 to i32
    %c0_i32_0 = arith.constant 0 : i32
    %2 = arith.cmpi ne, %1, %c0_i32_0 : i32
    scf.if %2 {
      %cst_15 = arith.constant 0.000000e+00 : f32
      %26 = vector.broadcast %cst_15 : f32 to vector<8x32xf32>
      %c0_16 = arith.constant 0 : index
      %c0_17 = arith.constant 0 : index
      %27 = vector.load %arg6[%c0_16, %c0_17] : memref<8x32xf32, #tpu.memory_space<vmem>>, vector<8x32xf32>
      tpu.vector_store %arg6[%c0_16, %c0_17], %26 {strides = array<i32>} : memref<8x32xf32, #tpu.memory_space<vmem>>, vector<8x32xf32>,
    } else {
    }
    %c0 = arith.constant 0 : index
    %c0_1 = arith.constant 0 : index
    %3 = vector.load %arg5[%c0, %c0_1] : memref<16x32xf32, #tpu.memory_space<vmem>>, vector<16x32xf32>
    %c0_2 = arith.constant 0 : index
    %c0_3 = arith.constant 0 : index
    %4 = vector.load %arg4[%c0_2, %c0_3] : memref<16x1xi32, #tpu.memory_space<vmem>>, vector<16x1xi32>
    %c0_4 = arith.constant 0 : index
    %c0_5 = arith.constant 0 : index
    %5 = vector.load %arg2[%c0_4, %c0_5] : memref<1x32xi32, #tpu.memory_space<vmem>>, vector<1x32xi32>
    %c0_6 = arith.constant 0 : index
    %c0_7 = arith.constant 0 : index
    %6 = vector.load %arg3[%c0_6, %c0_7] : memref<1x32xf32, #tpu.memory_space<vmem>>, vector<1x32xf32>
    %c0_i32_8 = arith.constant 0 : i32
    %7 = vector.broadcast %c0_i32_8 : i32 to vector<16x1xi32>
    %8 = arith.cmpi ne, %4, %7 : vector<16x1xi32>
    %cst = arith.constant 0.000000e+00 : f32
    %9 = vector.shape_cast %8 : vector<16x1xi1> to vector<16x1xi1>
    %10 = vector.broadcast %9 : vector<16x1xi1> to vector<16x32xi1>
    %11 = vector.broadcast %cst : f32 to vector<16x32xf32>
    %12 = arith.select %10, %3, %11 : vector<16x32xi1>, vector<16x32xf32>
    %13 = vector.broadcast %5 : vector<1x32xi32> to vector<16x32xi32>
    %14 = vector.broadcast %4 : vector<16x1xi32> to vector<16x32xi32>
    %15 = arith.cmpi eq, %13, %14 : vector<16x32xi32>
    %cst_9 = arith.constant 0.899999976 : f32
    %16 = vector.broadcast %cst_9 : f32 to vector<16x32xf32>
    %17 = vector.shape_cast %6 : vector<1x32xf32> to vector<1x32xf32>
    %18 = vector.broadcast %17 : vector<1x32xf32> to vector<16x32xf32>
    %19 = arith.select %15, %16, %18 : vector<16x32xi1>, vector<16x32xf32>
    %20 = arith.mulf %19, %12 : vector<16x32xf32>
    %c0_10 = arith.constant 0 : index
    %c0_11 = arith.constant 0 : index
    %21 = vector.load %arg6[%c0_10, %c0_11] : memref<8x32xf32, #tpu.memory_space<vmem>>, vector<1x32xf32>
    %cst_12 = arith.constant dense<0.000000e+00> : vector<32xf32>
    %22 = vector.multi_reduction <add>, %20, %cst_12 [0] : vector<16x32xf32> to vector<32xf32>
    %23 = vector.shape_cast %22 : vector<32xf32> to vector<1x32xf32>
    %24 = arith.addf %21, %23 : vector<1x32xf32>
    %c0_13 = arith.constant 0 : index
    %c0_14 = arith.constant 0 : index
    %25 = vector.load %arg6[%c0_13, %c0_14] : memref<8x32xf32, #tpu.memory_space<vmem>>, vector<1x32xf32>
    tpu.vector_store %arg6[%c0_13, %c0_14], %24 {strides = array<i32>} : memref<8x32xf32, #tpu.memory_space<vmem>>, vector<1x32xf32>,
    return
  }
  func.func @transform_0(%arg0: i32, %arg1: i32) -> (i32, i32) {
    %c0_i32 = arith.constant 0 : i32
    %c0_i32_0 = arith.constant 0 : i32
    %c0_i32_1 = arith.constant 0 : i32
    return %c0_i32, %c0_i32_0 : i32, i32
  }
  func.func @transform_1(%arg0: i32, %arg1: i32) -> (i32, i32) {
    %c0_i32 = arith.constant 0 : i32
    %c0_i32_0 = arith.constant 0 : i32
    %c0_i32_1 = arith.constant 0 : i32
    return %c0_i32, %c0_i32_0 : i32, i32
  }
  func.func @transform_2(%arg0: i32, %arg1: i32) -> (i32, i32) {
    %c1_i32 = arith.constant 1 : i32
    %0 = arith.muli %arg0, %c1_i32 : i32
    %1 = arith.addi %0, %arg1 : i32
    %c0_i32 = arith.constant 0 : i32
    %c0_i32_0 = arith.constant 0 : i32
    return %1, %c0_i32 : i32, i32
  }
  func.func @transform_3(%arg0: i32, %arg1: i32) -> (i32, i32) {
    %c1_i32 = arith.constant 1 : i32
    %0 = arith.muli %arg0, %c1_i32 : i32
    %1 = arith.addi %0, %arg1 : i32
    %c0_i32 = arith.constant 0 : i32
    %2 = arith.minsi %1, %c0_i32 : i32
    %c0_i32_0 = arith.constant 0 : i32
    %c0_i32_1 = arith.constant 0 : i32
    return %2, %c0_i32_0 : i32, i32
  }
  func.func @transform_4(%arg0: i32, %arg1: i32) -> (i32, i32) {
    %c0_i32 = arith.constant 0 : i32
    %c0_i32_0 = arith.constant 0 : i32
    return %arg0, %c0_i32 : i32, i32
  }
}

</mosaic_0001>

<llo_original>
// kernel: tpu_custom_call.1
$region0: #{tpu_custom_call.1}
  #allocation0 [shape = 'u32[]', space=smem, size = 0x4, offset = 0x4, fixed_abs, tag = 'smem constant byte address 0x4 - core index']
  #allocation1 [shape = 'u32[72,128]{1,0:T(1,128)}', space=vmem, size = 0x9000, scoped, tag = 'internal scratch']
  %s0 = inlined_call_operand.vmem [shape: s32[1,32], index: 0, kind: input, shape index: {}]
  %s1 = inlined_call_operand.hbm [shape: f32[1,32], index: 1, kind: input, shape index: {}]
  %s2 = inlined_call_operand.vmem [shape: s32[16,1], index: 2, kind: input, shape index: {}]
  %s3 = inlined_call_operand.vmem [shape: f32[16,32], index: 3, kind: input, shape index: {}]
  %s4 = inlined_call_operand.hbm [shape: f32[8,32], index: 4, kind: output, shape index: {}]
  %s5 = sld [smem:[#allocation0]]
  $region34: #{tpu_custom_call.1} parent=0
    _
  %s7 = ssub.s32 1, %s5
  %s8 = scalar_select 0, %s7, %s5
  $region1: #{tpu_custom_call.1} parent=0
    #allocation2 [shape = 'u8[512]{0}', space=vmem, size = 0x400, scoped, tag = 'input window, operand 1, single buffered']
    #allocation3 [shape = 's32[1]{0}', space=sflag, size = 0x4, scoped, tag = 'scoped memory for tpu_custom_call.1']
    #allocation4 [shape = 's32[1]{0}', space=sflag, size = 0x4, scoped, tag = 'scoped memory for tpu_custom_call.1']
    #allocation5 [shape = 'u8[4096]{0}', space=vmem, size = 0x1000, scoped, tag = 'output window, operand 0, single buffered']
    %9 = vsyncpa [#allocation3], 0
    %10 = vsyncpa [#allocation4], 0
    // Predicated region
    $region2: #{tpu_custom_call.1} parent=1 // pred_check
      _
    $region3: #{tpu_custom_call.1} parent=1 // pred_check_branch
      %12 = sbr.rel (0) target = $region5
    $region4: #{tpu_custom_call.1} parent=1 // pred_region
      _
    $region5: #{tpu_custom_call.1} parent=1 // pred_fallthru
      _
    // Predicated region
    $region6: #{tpu_custom_call.1} parent=1 // pred_check
      _
    $region7: #{tpu_custom_call.1} parent=1 // pred_check_branch
      %14 = sbr.rel (0) target = $region9
    $region8: #{tpu_custom_call.1} parent=1 // pred_region
      %16 = vsyncadd [#allocation3], 0
      %s18 = sshll.u32 %s1, 4
      %s19 = int_to_ptr.hbm [resolvable:$true] %s18
      %s20 = sshll.u32 [#allocation2], 4
      %s21 = int_to_ptr.vmem [resolvable:$true] %s20
      %23 = dma.hbm_to_vmem [thread:$0]  %s19, 16, %s21, [#allocation3]
    $region9: #{tpu_custom_call.1} parent=1 // pred_fallthru
      _
    // Predicated region
    $region10: #{tpu_custom_call.1} parent=1 // pred_check
      _
    $region11: #{tpu_custom_call.1} parent=1 // pred_check_branch
      %25 = sbr.rel (0) target = $region13
    $region12: #{tpu_custom_call.1} parent=1 // pred_region
      %s26 = sadd.s32 0, 0
      %s27 = smul.u32 2, %s26
      %p28 = scmp.lt.s32.totalorder %s27, 1
      %s29 = scalar_select %p28, %s27, 1
      %s30 = smul.addr %s29, 8
      %s31 = scalar_lea.vmem %s2, %s30
      %s32 = sadd.s32 0, 0
      %s33 = smul.u32 2, %s32
    $region13: #{tpu_custom_call.1} parent=1 // pred_fallthru
      _
    // Predicated region
    $region14: #{tpu_custom_call.1} parent=1 // pred_check
      _
    $region15: #{tpu_custom_call.1} parent=1 // pred_check_branch
      %35 = sbr.rel (0) target = $region17
    $region16: #{tpu_custom_call.1} parent=1 // pred_region
      %s36 = sadd.s32 0, 0
      %p37 = scmp.lt.s32.totalorder %s36, 0
      %s38 = scalar_select %p37, %s36, 0
      %s39 = smul.u32 2, %s38
      %p40 = scmp.lt.s32.totalorder %s39, 1
      %s41 = scalar_select %p40, %s39, 1
      %s42 = smul.addr %s41, 8
      %s43 = scalar_lea.vmem %s3, %s42
      %s44 = sadd.s32 0, 0
      %p45 = scmp.lt.s32.totalorder %s44, 0
      %s46 = scalar_select %p45, %s44, 0
      %s47 = smul.u32 2, %s46
    $region17: #{tpu_custom_call.1} parent=1 // pred_fallthru
      _
    // Predicated region
    $region18: #{tpu_custom_call.1} parent=1 // pred_check
      _
    $region19: #{tpu_custom_call.1} parent=1 // pred_check_branch
      %49 = sbr.rel (0) target = $region21
    $region20: #{tpu_custom_call.1} parent=1 // pred_region
      %51 = dma.done [#allocation3], 16
    $region21: #{tpu_custom_call.1} parent=1 // pred_fallthru
      _
    %s52 = sadd.s32 0, 0
    %s53 = smul.u32 2, %s52
    %p54 = scmp.lt.s32.totalorder %s53, 1
    %s55 = scalar_select %p54, %s53, 1
    %s56 = smul.addr %s55, 8
    %s57 = scalar_lea.vmem %s2, %s56
    %s58 = sadd.s32 0, 0
    %p59 = scmp.lt.s32.totalorder %s58, 0
    %s60 = scalar_select %p59, %s58, 0
    %s61 = smul.u32 2, %s60
    %p62 = scmp.lt.s32.totalorder %s61, 1
    %s63 = scalar_select %p62, %s61, 1
    %s64 = smul.addr %s63, 8
    %s65 = scalar_lea.vmem %s3, %s64
    %s66 = sadd.s32 0, 0
    %s67 = smul.u32 2, %s66
    %p68 = scmp.lt.s32.totalorder %s67, 1
    %s69 = scalar_select %p68, %s67, 1
    %s70 = smul.addr %s69, 8
    %s71 = scalar_lea.vmem %s2, %s70
    %s72 = sadd.s32 0, 0
    %s73 = smul.u32 2, %s72
    %s74 = sadd.s32 0, 0
    %p75 = scmp.lt.s32.totalorder %s74, 0
    %s76 = scalar_select %p75, %s74, 0
    %s77 = smul.u32 2, %s76
    %p78 = scmp.lt.s32.totalorder %s77, 1
    %s79 = scalar_select %p78, %s77, 1
    %s80 = smul.addr %s79, 8
    %s81 = scalar_lea.vmem %s3, %s80
    %s82 = sadd.s32 0, 0
    %p83 = scmp.lt.s32.totalorder %s82, 0
    %s84 = scalar_select %p83, %s82, 0
    %s85 = smul.u32 2, %s84
    %p86 = scmp.eq.s32.totalorder 0, 0
    // Predicated region
    $region22: #{tpu_custom_call.1} parent=1 // pred_check
      %p87 = pneg %p86
    $region23: #{tpu_custom_call.1} parent=1 // pred_check_branch
      %89 = sbr.rel (%p87) target = $region25
    $region24: #{tpu_custom_call.1} parent=1 // pred_region
      %vm90 = vcmask 261120
      %91 = vst.msk [vmem:[#allocation5] sm:$0xff] %vm90, 0.0
    $region25: #{tpu_custom_call.1} parent=1 // pred_fallthru
      _
    %v92 = vld [vmem:[%s81] sm:$0xff]
    %v93 = vld [vmem:[%s81 + $0x8] sm:$0xff]
    %v94 = vld [vmem:[%s71] sm:$0xff]
    %v95 = vld [vmem:[%s71 + $0x8] sm:$0xff]
    %v96 = vld [vmem:[%s0] sm:$0x1]
    %v97 = vld [vmem:[#allocation2] sm:$0x1]
    %vm98 = vcmp.ne.s32.totalorder %v94, 0
    %vm99 = vcmp.ne.s32.totalorder %v95, 0
    %v100 = vsel %vm98, 1, 0
    %v101 = vsel %vm99, 1, 0
    %102 = vset.pattern.permute.xlu0 0
    %103 = vperm.xlu0 %102, %v100
    %v104 = vpop.permute.xlu0 %103
    %105 = vset.pattern.permute.xlu0 0
    %106 = vperm.xlu0 %105, %v101
    %v107 = vpop.permute.xlu0 %106
    %vm108 = vcmp.eq.s32.totalorder %v104, 1
    %vm109 = vcmp.eq.s32.totalorder %v107, 1
    %v110 = vsel %vm108, %v92, 0.0
    %v111 = vsel %vm109, %v93, 0.0
    %v112 = vperm.slane %v96, 0
    %113 = vset.pattern.permute.xlu0 0
    %114 = vperm.xlu0 %113, %v94
    %v115 = vpop.permute.xlu0 %114
    %116 = vset.pattern.permute.xlu0 0
    %117 = vperm.xlu0 %116, %v95
    %v118 = vpop.permute.xlu0 %117
    %vm119 = vcmp.eq.s32.totalorder %v112, %v115
    %vm120 = vcmp.eq.s32.totalorder %v112, %v118
    %v122 = vperm.slane %v97, 0
    %v124 = vsel %vm119, 0.9, %v122
    %v125 = vsel %vm120, 0.9, %v122
    %v126 = vmul.f32 %v124, %v110
    %v127 = vmul.f32 %v125, %v111
    %v128 = vld [vmem:[#allocation5] sm:$0x1]
    %vm129 = vcmask 261120
    %v130 = vsel %vm129, %v126, 0.0
    %v131 = vsel %vm129, %v127, 0.0
    %v132 = vadd.f32 %v130, %v131
    %v133 = vrot.slane %v132, 4
    %v134 = vadd.f32 %v132, %v133
    %v135 = vrot.slane %v134, 2
    %v136 = vadd.f32 %v134, %v135
    %v137 = vrot.slane %v136, 1
    %v138 = vadd.f32 %v136, %v137
    %v139 = vadd.f32 %v128, %v138
    %vm140 = vcmask 253952
    %141 = vst.msk [vmem:[#allocation5] sm:$0x1] %vm140, %v139
    // Predicated region
    $region26: #{tpu_custom_call.1} parent=1 // pred_check
      _
    $region27: #{tpu_custom_call.1} parent=1 // pred_check_branch
      %143 = sbr.rel (0) target = $region29
    $region28: #{tpu_custom_call.1} parent=1 // pred_region
      %145 = vsyncadd [#allocation4], 0
      %s147 = sshll.u32 [#allocation5], 4
      %s148 = int_to_ptr.vmem [resolvable:$true] %s147
      %s149 = sshll.u32 %s4, 4
      %s150 = int_to_ptr.hbm [resolvable:$true] %s149
      %152 = dma.vmem_to_hbm [thread:$0]  %s148, 128, %s150, [#allocation4]
    $region29: #{tpu_custom_call.1} parent=1 // pred_fallthru
      _
    // Predicated region
    $region30: #{tpu_custom_call.1} parent=1 // pred_check
      _
    $region31: #{tpu_custom_call.1} parent=1 // pred_check_branch
      %154 = sbr.rel (0) target = $region33
    $region32: #{tpu_custom_call.1} parent=1 // pred_region
      %156 = dma.done [#allocation4], 128
    $region33: #{tpu_custom_call.1} parent=1 // pred_fallthru
      _
    %157 = vsyncpa [#allocation3], 1
    %158 = vsyncpa [#allocation4], 1

</llo_original>
